<compile_context>
chip_gen: v5e
topology: v5e:2x2
jax: 0.10.0
libtpu: 0.0.40
codegen_flags: <defaults>
</compile_context>

<pallas_src>
import jax
import jax.numpy as jnp
from jax.experimental import pallas as pl
from jax.experimental.pallas import tpu as pltpu


def _vmem_limit(needed_bytes):
    """Clamp an estimated VMEM need to a safe explicit scoped limit."""
    return int(min(64 * 1024 * 1024, max(2 * int(needed_bytes), 16 * 1024 * 1024)))


def _sigmoid_via_tanh(x):
    # sigmoid(x) == 0.5 * tanh(0.5 * x) + 0.5 : one EUP push + VPU fma
    return 0.5 * jnp.tanh(0.5 * x) + 0.5


# --------------------------- single-step cell ---------------------------

def _lstm_cell_kernel(z_ref, c_ref, wu_ref, b_ref, h_out_ref, c_out_ref):
    # One fused MXU matmul: [x, h] @ [W; U] -> (TB, 4H) f32 pre-activations.
    pre = jnp.dot(z_ref[...], wu_ref[...], preferred_element_type=jnp.float32)
    pre = pre + b_ref[...]  # (1, 4H) broadcast over rows

    H = c_ref.shape[-1]
    i_gate = _sigmoid_via_tanh(pre[:, 0 * H:1 * H])
    f_gate = _sigmoid_via_tanh(pre[:, 1 * H:2 * H])
    c_bar = jnp.tanh(pre[:, 2 * H:3 * H])
    o_gate = _sigmoid_via_tanh(pre[:, 3 * H:4 * H])

    new_c = f_gate * c_ref[...] + i_gate * c_bar
    new_h = o_gate * jnp.tanh(new_c)

    h_out_ref[...] = new_h.astype(h_out_ref.dtype)
    c_out_ref[...] = new_c  # cell state stays f32 regardless of x dtype


def prepare_cell_weights(W_stack, U_stack, b_stack):
    """Hoisted once: stack [W; U] and cast matmul operands to bf16."""
    WU = jnp.concatenate([W_stack, U_stack], axis=0).astype(jnp.bfloat16)  # (D+H, 4H)
    b = b_stack.astype(jnp.float32)                                        # (1, 4H)
    return WU, b


def lstm_lr_cell(x, h, c, WU, b, *, block_b=None):
    """Single LSTMLRCell step (matches the PyTorch module forward).

    x: (B, D), h/c: (B, H); WU: (D+H, 4H) bf16; b: (1, 4H) f32, gate order [i,f,c~,o].
    Returns (new_h [x.dtype], new_c [f32]).
    """
    B, D = x.shape
    _, H = h.shape
    K = D + H
    assert WU.shape == (K, 4 * H)

    z = jnp.concatenate([x, h], axis=1).astype(jnp.bfloat16)  # (B, D+H)
    c32 = c.astype(jnp.float32)

    if block_b is None:
        # Largest tile that comfortably fits; multiple-of-16 rows for bf16
        # sublane packing.  (On v7x pick block_b ~ B/2 for >= 2 grid steps.)
        block_b = B if B <= 512 else 512
    grid = (pl.cdiv(B, block_b),)

    weight_bytes = WU.size * WU.dtype.itemsize + b.size * 4
    tile_bytes = block_b * (K * 2 + H * 4 + H * x.dtype.itemsize + H * 4 + 4 * H * 4)
    vmem_limit = _vmem_limit(weight_bytes + 2 * tile_bytes)

    new_h, new_c = pl.pallas_call(
        _lstm_cell_kernel,
        out_shape=(jax.ShapeDtypeStruct((B, H), x.dtype),
                   jax.ShapeDtypeStruct((B, H), jnp.float32)),
        grid=grid,
        in_specs=[
            pl.BlockSpec((block_b, K), lambda i: (i, 0)),     # [x, h] tile
            pl.BlockSpec((block_b, H), lambda i: (i, 0)),     # c tile
            pl.BlockSpec((K, 4 * H), lambda i: (0, 0)),       # weights: resident
            pl.BlockSpec((1, 4 * H), lambda i: (0, 0)),       # bias: resident
        ],
        out_specs=(pl.BlockSpec((block_b, H), lambda i: (i, 0)),
                   pl.BlockSpec((block_b, H), lambda i: (i, 0))),
        compiler_params=pltpu.CompilerParams(
            dimension_semantics=("parallel",),
            vmem_limit_bytes=vmem_limit),
    )(z, c32, WU, b)
    return new_h, new_c


# --------------------------- in-kernel sequence ---------------------------

def _lstm_seq_kernel(x_ref, h0_ref, c0_ref, w_ref, u_ref, b_ref,
                     h_seq_ref, c_out_ref, h_sc, c_sc):
    t = pl.program_id(1)

    @pl.when(t == 0)
    def _():
        h_sc[...] = h0_ref[...]
        c_sc[...] = c0_ref[...]

    H = h_sc.shape[-1]
    # Two accumulating MXU dots (x_t @ W) + (h @ U); f32 accumulation.
    pre = jnp.dot(x_ref[0], w_ref[...], preferred_element_type=jnp.float32)
    pre = pre + jnp.dot(h_sc[...].astype(jnp.bfloat16), u_ref[...],
                        preferred_element_type=jnp.float32)
    pre = pre + b_ref[...]

    i_gate = _sigmoid_via_tanh(pre[:, 0 * H:1 * H])
    f_gate = _sigmoid_via_tanh(pre[:, 1 * H:2 * H])
    c_bar = jnp.tanh(pre[:, 2 * H:3 * H])
    o_gate = _sigmoid_via_tanh(pre[:, 3 * H:4 * H])

    new_c = f_gate * c_sc[...] + i_gate * c_bar
    new_h = o_gate * jnp.tanh(new_c)

    h_sc[...] = new_h
    c_sc[...] = new_c
    h_seq_ref[0] = new_h.astype(h_seq_ref.dtype)
    c_out_ref[...] = new_c  # revisited block: final value written back at the end


def lstm_lr_sequence(x_seq, h0, c0, W_stack, U_stack, b_stack, *, block_b=None):
    """Roll the cell over a sequence inside ONE kernel (weights resident).

    x_seq: (T, B, D); h0/c0: (B, H).
    Returns (h_seq (T,B,H) in x dtype, h_final (B,H), c_final (B,H) f32).
    """
    T, B, D = x_seq.shape
    _, H = h0.shape

    x_bf = x_seq.astype(jnp.bfloat16)
    W = W_stack.astype(jnp.bfloat16)        # (D, 4H)
    U = U_stack.astype(jnp.bfloat16)        # (H, 4H)
    b = b_stack.astype(jnp.float32)         # (1, 4H)
    h0f = h0.astype(jnp.float32)
    c0f = c0.astype(jnp.float32)

    if block_b is None:
        block_b = B if B <= 512 else 512
    grid = (pl.cdiv(B, block_b), T)         # T is the inner, sequential axis

    weight_bytes = (W.size + U.size) * 2 + b.size * 4
    tile_bytes = block_b * (D * 2 + 2 * H * 4                 # x_t + h0/c0 tiles
                            + H * x_seq.dtype.itemsize + H * 4  # outputs
                            + 2 * H * 4 + 4 * H * 4)            # scratch + pre
    vmem_limit = _vmem_limit(weight_bytes + 2 * tile_bytes)

    h_seq, c_final = pl.pallas_call(
        _lstm_seq_kernel,
        out_shape=(jax.ShapeDtypeStruct((T, B, H), x_seq.dtype),
                   jax.ShapeDtypeStruct((B, H), jnp.float32)),
        grid=grid,
        in_specs=[
            pl.BlockSpec((1, block_b, D), lambda bi, t: (t, bi, 0)),  # x_t tile
            pl.BlockSpec((block_b, H), lambda bi, t: (bi, 0)),        # h0
            pl.BlockSpec((block_b, H), lambda bi, t: (bi, 0)),        # c0
            pl.BlockSpec((D, 4 * H), lambda bi, t: (0, 0)),           # W resident
            pl.BlockSpec((H, 4 * H), lambda bi, t: (0, 0)),           # U resident
            pl.BlockSpec((1, 4 * H), lambda bi, t: (0, 0)),           # bias resident
        ],
        out_specs=(pl.BlockSpec((1, block_b, H), lambda bi, t: (t, bi, 0)),
                   pl.BlockSpec((block_b, H), lambda bi, t: (bi, 0))),
        scratch_shapes=[pltpu.VMEM((block_b, H), jnp.float32),   # h carry
                        pltpu.VMEM((block_b, H), jnp.float32)],  # c carry
        compiler_params=pltpu.CompilerParams(
            dimension_semantics=("parallel", "arbitrary"),
            vmem_limit_bytes=vmem_limit),
    )(x_bf, h0f, c0f, W, U, b)

    h_final = h_seq[-1]
    return h_seq, h_final, c_final


# --------------------------- pure-JAX references ---------------------------

def reference_cell(x, h, c, W_stack, U_stack, b_stack):
    H = h.shape[-1]
    pre = x @ W_stack + h @ U_stack + b_stack
    i = jax.nn.sigmoid(pre[:, 0 * H:1 * H])
    f = jax.nn.sigmoid(pre[:, 1 * H:2 * H])
    c_bar = jnp.tanh(pre[:, 2 * H:3 * H])
    o = jax.nn.sigmoid(pre[:, 3 * H:4 * H])
    new_c = f * c + i * c_bar
    new_h = o * jnp.tanh(new_c)
    return new_h, new_c


def reference_sequence(x_seq, h0, c0, W_stack, U_stack, b_stack):
    def step(carry, x_t):
        h, c = carry
        h, c = reference_cell(x_t, h, c, W_stack, U_stack, b_stack)
        return (h, c), h
    (h_f, c_f), h_seq = jax.lax.scan(step, (h0, c0), x_seq)
    return h_seq, h_f, c_f


if __name__ == "__main__":
    B, input_size, hidden_size, T = 8, 16, 32, 8

    key = jax.random.PRNGKey(0)
    keys = jax.random.split(key, 14)

    # Deterministic synthetic parameters (0.1 * randn, ones for biases),
    # mirroring LSTMLRCell.__init__ with wRank=None, uRank=None.
    W1, W2, W3, W4 = (0.1 * jax.random.normal(keys[i], (input_size, hidden_size),
                                              dtype=jnp.float32) for i in range(4))
    U1, U2, U3, U4 = (0.1 * jax.random.normal(keys[4 + i], (hidden_size, hidden_size),
                                              dtype=jnp.float32) for i in range(4))
    bias_i = jnp.ones((1, hidden_size), jnp.float32)
    bias_f = jnp.ones((1, hidden_size), jnp.float32)
    bias_c = jnp.ones((1, hidden_size), jnp.float32)
    bias_o = jnp.ones((1, hidden_size), jnp.float32)

    # Stack in gate order [i, f, c~, o] (W1/U1/bias_i, W2/U2/bias_f, ...).
    W_stack = jnp.concatenate([W1, W2, W3, W4], axis=1)                  # (D, 4H)
    U_stack = jnp.concatenate([U1, U2, U3, U4], axis=1)                  # (H, 4H)
    b_stack = jnp.concatenate([bias_i, bias_f, bias_c, bias_o], axis=1)  # (1, 4H)

    # Example inputs.
    x = jax.random.normal(keys[8], (B, input_size), dtype=jnp.float32)
    h = jax.random.normal(keys[9], (B, hidden_size), dtype=jnp.float32)
    c = jax.random.normal(keys[10], (B, hidden_size), dtype=jnp.float32)
    x_seq = jax.random.normal(keys[11], (T, B, input_size), dtype=jnp.float32)

    # ---- single-step cell (module forward semantics) ----
    WU, b_prep = prepare_cell_weights(W_stack, U_stack, b_stack)  # hoisted once
    new_h, new_c = lstm_lr_cell(x, h, c, WU, b_prep)
    jax.block_until_ready((new_h, new_c))

    ref_h, ref_c = reference_cell(x, h, c, W_stack, U_stack, b_stack)
    # bf16 matmul operands with f32 accumulation -> loosen tolerance vs f32 ref.
    assert jnp.allclose(new_h, ref_h, atol=3e-2, rtol=3e-2), "new_h mismatch"
    assert jnp.allclose(new_c, ref_c, atol=3e-2, rtol=3e-2), "new_c mismatch"

    # ---- in-kernel sequence rollout (amortizes weight traffic over T) ----
    h_all, h_fin, c_fin = lstm_lr_sequence(x_seq, h, c, W_stack, U_stack, b_stack)
    jax.block_until_ready((h_all, h_fin, c_fin))

    ref_hseq, ref_hf, ref_cf = reference_sequence(x_seq, h, c, W_stack, U_stack, b_stack)
    assert jnp.allclose(h_all, ref_hseq, atol=5e-2, rtol=5e-2), "h_seq mismatch"
    assert jnp.allclose(h_fin, ref_hf, atol=5e-2, rtol=5e-2), "h_final mismatch"
    assert jnp.allclose(c_fin, ref_cf, atol=5e-2, rtol=5e-2), "c_final mismatch"

    print("KERNEL_OK")
</pallas_src>

<mosaic_0001>
module attributes {stable_mosaic.version = 11 : i64} {
  func.func @_lstm_cell_kernel(%arg0: i32, %arg1: memref<8x48xbf16, #tpu.memory_space<vmem>>, %arg2: memref<8x32xf32, #tpu.memory_space<vmem>>, %arg3: memref<48x128xbf16, #tpu.memory_space<vmem>>, %arg4: memref<1x128xf32, #tpu.memory_space<vmem>>, %arg5: memref<8x32xf32, #tpu.memory_space<vmem>>, %arg6: memref<8x32xf32, #tpu.memory_space<vmem>>) attributes {dimension_semantics = [#tpu.dimension_semantics<parallel>], iteration_bounds = array<i64: 1>, scalar_prefetch = 0 : i64, scratch_operands = 0 : i64, tpu.core_type = #tpu.core_type<tc>, window_params = [{transform_indices = @transform_0, window_bounds = array<i64: 8, 48>}, {transform_indices = @transform_1, window_bounds = array<i64: 8, 32>}, {pipeline_mode = #tpu.pipeline_mode<synchronous>, transform_indices = @transform_2, window_bounds = array<i64: 48, 128>}, {pipeline_mode = #tpu.pipeline_mode<synchronous>, transform_indices = @transform_3, window_bounds = array<i64: 1, 128>}, {transform_indices = @transform_4, window_bounds = array<i64: 8, 32>}, {transform_indices = @transform_5, window_bounds = array<i64: 8, 32>}]} {
    %c0 = arith.constant 0 : index
    %c0_0 = arith.constant 0 : index
    %0 = vector.load %arg1[%c0, %c0_0] : memref<8x48xbf16, #tpu.memory_space<vmem>>, vector<8x48xbf16>
    %c0_1 = arith.constant 0 : index
    %c0_2 = arith.constant 0 : index
    %1 = vector.load %arg3[%c0_1, %c0_2] : memref<48x128xbf16, #tpu.memory_space<vmem>>, vector<48x128xbf16>
    %cst = arith.constant dense<0.000000e+00> : vector<8x128xf32>
    %2 = tpu.matmul %0, %1, %cst {dimension_numbers = #tpu.dot_dimension_numbers<[1], [0], [0], [1], [0, 0, 1, 1], [], []>} : vector<8x48xbf16>, vector<48x128xbf16>, vector<8x128xf32> -> vector<8x128xf32>
    %c0_3 = arith.constant 0 : index
    %c0_4 = arith.constant 0 : index
    %3 = vector.load %arg4[%c0_3, %c0_4] : memref<1x128xf32, #tpu.memory_space<vmem>>, vector<1x128xf32>
    %4 = vector.broadcast %3 : vector<1x128xf32> to vector<8x128xf32>
    %5 = arith.addf %2, %4 : vector<8x128xf32>
    %6 = vector.extract_strided_slice %5 {offsets = [0, 0], sizes = [8, 32], strides = [1, 1]} : vector<8x128xf32> to vector<8x32xf32>
    %cst_5 = arith.constant 5.000000e-01 : f32
    %7 = vector.broadcast %cst_5 : f32 to vector<8x32xf32>
    %8 = arith.mulf %7, %6 : vector<8x32xf32>
    %9 = math.tanh %8 : vector<8x32xf32>
    %cst_6 = arith.constant 5.000000e-01 : f32
    %10 = vector.broadcast %cst_6 : f32 to vector<8x32xf32>
    %11 = arith.mulf %10, %9 : vector<8x32xf32>
    %cst_7 = arith.constant 5.000000e-01 : f32
    %12 = vector.broadcast %cst_7 : f32 to vector<8x32xf32>
    %13 = arith.addf %11, %12 : vector<8x32xf32>
    %14 = vector.extract_strided_slice %5 {offsets = [0, 32], sizes = [8, 32], strides = [1, 1]} : vector<8x128xf32> to vector<8x32xf32>
    %cst_8 = arith.constant 5.000000e-01 : f32
    %15 = vector.broadcast %cst_8 : f32 to vector<8x32xf32>
    %16 = arith.mulf %15, %14 : vector<8x32xf32>
    %17 = math.tanh %16 : vector<8x32xf32>
    %cst_9 = arith.constant 5.000000e-01 : f32
    %18 = vector.broadcast %cst_9 : f32 to vector<8x32xf32>
    %19 = arith.mulf %18, %17 : vector<8x32xf32>
    %cst_10 = arith.constant 5.000000e-01 : f32
    %20 = vector.broadcast %cst_10 : f32 to vector<8x32xf32>
    %21 = arith.addf %19, %20 : vector<8x32xf32>
    %22 = vector.extract_strided_slice %5 {offsets = [0, 64], sizes = [8, 32], strides = [1, 1]} : vector<8x128xf32> to vector<8x32xf32>
    %23 = math.tanh %22 : vector<8x32xf32>
    %24 = vector.extract_strided_slice %5 {offsets = [0, 96], sizes = [8, 32], strides = [1, 1]} : vector<8x128xf32> to vector<8x32xf32>
    %cst_11 = arith.constant 5.000000e-01 : f32
    %25 = vector.broadcast %cst_11 : f32 to vector<8x32xf32>
    %26 = arith.mulf %25, %24 : vector<8x32xf32>
    %27 = math.tanh %26 : vector<8x32xf32>
    %cst_12 = arith.constant 5.000000e-01 : f32
    %28 = vector.broadcast %cst_12 : f32 to vector<8x32xf32>
    %29 = arith.mulf %28, %27 : vector<8x32xf32>
    %cst_13 = arith.constant 5.000000e-01 : f32
    %30 = vector.broadcast %cst_13 : f32 to vector<8x32xf32>
    %31 = arith.addf %29, %30 : vector<8x32xf32>
    %c0_14 = arith.constant 0 : index
    %c0_15 = arith.constant 0 : index
    %32 = vector.load %arg2[%c0_14, %c0_15] : memref<8x32xf32, #tpu.memory_space<vmem>>, vector<8x32xf32>
    %33 = arith.mulf %21, %32 : vector<8x32xf32>
    %34 = arith.mulf %13, %23 : vector<8x32xf32>
    %35 = arith.addf %33, %34 : vector<8x32xf32>
    %36 = math.tanh %35 : vector<8x32xf32>
    %37 = arith.mulf %31, %36 : vector<8x32xf32>
    %c0_16 = arith.constant 0 : index
    %c0_17 = arith.constant 0 : index
    %38 = vector.load %arg5[%c0_16, %c0_17] : memref<8x32xf32, #tpu.memory_space<vmem>>, vector<8x32xf32>
    tpu.vector_store %arg5[%c0_16, %c0_17], %37 {strides = array<i32>} : memref<8x32xf32, #tpu.memory_space<vmem>>, vector<8x32xf32>,
    %c0_18 = arith.constant 0 : index
    %c0_19 = arith.constant 0 : index
    %39 = vector.load %arg6[%c0_18, %c0_19] : memref<8x32xf32, #tpu.memory_space<vmem>>, vector<8x32xf32>
    tpu.vector_store %arg6[%c0_18, %c0_19], %35 {strides = array<i32>} : memref<8x32xf32, #tpu.memory_space<vmem>>, vector<8x32xf32>,
    return
  }
  func.func @transform_0(%arg0: i32) -> (i32, i32) {
    %c0_i32 = arith.constant 0 : i32
    %c0_i32_0 = arith.constant 0 : i32
    return %arg0, %c0_i32 : i32, i32
  }
  func.func @transform_1(%arg0: i32) -> (i32, i32) {
    %c0_i32 = arith.constant 0 : i32
    %c0_i32_0 = arith.constant 0 : i32
    return %arg0, %c0_i32 : i32, i32
  }
  func.func @transform_2(%arg0: i32) -> (i32, i32) {
    %c0_i32 = arith.constant 0 : i32
    %c0_i32_0 = arith.constant 0 : i32
    %c0_i32_1 = arith.constant 0 : i32
    return %c0_i32, %c0_i32_0 : i32, i32
  }
  func.func @transform_3(%arg0: i32) -> (i32, i32) {
    %c0_i32 = arith.constant 0 : i32
    %c0_i32_0 = arith.constant 0 : i32
    %c0_i32_1 = arith.constant 0 : i32
    return %c0_i32, %c0_i32_0 : i32, i32
  }
  func.func @transform_4(%arg0: i32) -> (i32, i32) {
    %c0_i32 = arith.constant 0 : i32
    %c0_i32_0 = arith.constant 0 : i32
    return %arg0, %c0_i32 : i32, i32
  }
  func.func @transform_5(%arg0: i32) -> (i32, i32) {
    %c0_i32 = arith.constant 0 : i32
    %c0_i32_0 = arith.constant 0 : i32
    return %arg0, %c0_i32 : i32, i32
  }
}

</mosaic_0001>

<llo_original>
// kernel: tpu_custom_call.1
$region0: #{tpu_custom_call.1}
  #allocation0 [shape = 'u32[]', space=smem, size = 0x4, offset = 0x4, fixed_abs, tag = 'smem constant byte address 0x4 - core index']
  #allocation1 [shape = 'u32[72,128]{1,0:T(1,128)}', space=vmem, size = 0x9000, scoped, tag = 'internal scratch']
  %s0 = inlined_call_operand.hbm [shape: bf16[8,48], index: 0, kind: input, shape index: {}]
  %s1 = inlined_call_operand.hbm [shape: f32[8,32], index: 1, kind: input, shape index: {}]
  %s2 = inlined_call_operand.hbm [shape: bf16[48,128], index: 2, kind: input, shape index: {}]
  %s3 = inlined_call_operand.vmem [shape: f32[1,128], index: 3, kind: input, shape index: {}]
  %s4 = inlined_call_operand.hbm [shape: f32[8,32], index: 4, kind: output, shape index: {0}]
  %s5 = inlined_call_operand.hbm [shape: f32[8,32], index: 5, kind: output, shape index: {1}]
  %6 = xla_tuple %s4, %s5
  %s7 = sld [smem:[#allocation0]]
  $region46: #{tpu_custom_call.1} parent=0
    _
  %s9 = ssub.s32 1, %s7
  %s10 = scalar_select 0, %s9, %s7
  $region1: #{tpu_custom_call.1} parent=0
    #allocation2 [shape = 'u8[2048]{0}', space=vmem, size = 0x800, scoped, tag = 'input window, operand 0, single buffered']
    #allocation3 [shape = 's32[1]{0}', space=sflag, size = 0x4, scoped, tag = 'scoped memory for tpu_custom_call.1']
    #allocation4 [shape = 's32[1]{0}', space=sflag, size = 0x4, scoped, tag = 'scoped memory for tpu_custom_call.1']
    #allocation5 [shape = 'u8[4096]{0}', space=vmem, size = 0x1000, scoped, tag = 'input window, operand 1, single buffered']
    #allocation6 [shape = 's32[1]{0}', space=sflag, size = 0x4, scoped, tag = 'scoped memory for tpu_custom_call.1']
    #allocation7 [shape = 'u8[12288]{0}', space=vmem, size = 0x3000, scoped, tag = 'input window, operand 2, single buffered']
    #allocation8 [shape = 'u8[4096]{0}', space=vmem, size = 0x1000, scoped, tag = 'output window, operand 0, single buffered']
    #allocation9 [shape = 'u8[4096]{0}', space=vmem, size = 0x1000, scoped, tag = 'output window, operand 1, single buffered']
    #allocation10 [shape = 's32[1]{0}', space=sflag, size = 0x4, scoped, tag = 'scoped memory for tpu_custom_call.1']
    %11 = vsyncpa [#allocation3], 0
    %12 = vsyncpa [#allocation6], 0
    %13 = vsyncpa [#allocation4], 0
    %14 = vsyncpa [#allocation10], 0
    // Predicated region
    $region2: #{tpu_custom_call.1} parent=1 // pred_check
      _
    $region3: #{tpu_custom_call.1} parent=1 // pred_check_branch
      %16 = sbr.rel (0) target = $region5
    $region4: #{tpu_custom_call.1} parent=1 // pred_region
      %18 = vsyncadd [#allocation3], 0
      %s20 = sshll.u32 %s0, 4
      %s21 = int_to_ptr.hbm [resolvable:$true] %s20
      %s22 = sshll.u32 [#allocation2], 4
      %s23 = int_to_ptr.vmem [resolvable:$true] %s22
      %25 = dma.hbm_to_vmem [thread:$0]  %s21, 64, %s23, [#allocation3]
    $region5: #{tpu_custom_call.1} parent=1 // pred_fallthru
      _
    // Predicated region
    $region6: #{tpu_custom_call.1} parent=1 // pred_check
      _
    $region7: #{tpu_custom_call.1} parent=1 // pred_check_branch
      %27 = sbr.rel (0) target = $region9
    $region8: #{tpu_custom_call.1} parent=1 // pred_region
      %29 = vsyncadd [#allocation6], 0
      %s31 = sshll.u32 %s1, 4
      %s32 = int_to_ptr.hbm [resolvable:$true] %s31
      %s33 = sshll.u32 [#allocation5], 4
      %s34 = int_to_ptr.vmem [resolvable:$true] %s33
      %36 = dma.hbm_to_vmem [thread:$0]  %s32, 128, %s34, [#allocation6]
    $region9: #{tpu_custom_call.1} parent=1 // pred_fallthru
      _
    // Predicated region
    $region10: #{tpu_custom_call.1} parent=1 // pred_check
      _
    $region11: #{tpu_custom_call.1} parent=1 // pred_check_branch
      %38 = sbr.rel (0) target = $region13
    $region12: #{tpu_custom_call.1} parent=1 // pred_region
      %40 = vsyncadd [#allocation6], 0
      %s41 = sshll.u32 %s2, 4
      %s42 = int_to_ptr.hbm [resolvable:$true] %s41
      %s43 = sshll.u32 [#allocation7], 4
      %s44 = int_to_ptr.vmem [resolvable:$true] %s43
      %49 = dma.hbm_to_vmem [thread:$0]  %s42, 384, %s44, [#allocation6], 64, 64, 4
    $region13: #{tpu_custom_call.1} parent=1 // pred_fallthru
      _
    // Predicated region
    $region14: #{tpu_custom_call.1} parent=1 // pred_check
      _
    $region15: #{tpu_custom_call.1} parent=1 // pred_check_branch
      %51 = sbr.rel (0) target = $region17
    $region16: #{tpu_custom_call.1} parent=1 // pred_region
      _
    $region17: #{tpu_custom_call.1} parent=1 // pred_fallthru
      _
    // Predicated region
    $region18: #{tpu_custom_call.1} parent=1 // pred_check
      _
    $region19: #{tpu_custom_call.1} parent=1 // pred_check_branch
      %53 = sbr.rel (0) target = $region21
    $region20: #{tpu_custom_call.1} parent=1 // pred_region
      %55 = dma.done [#allocation3], 64
    $region21: #{tpu_custom_call.1} parent=1 // pred_fallthru
      _
    // Predicated region
    $region22: #{tpu_custom_call.1} parent=1 // pred_check
      _
    $region23: #{tpu_custom_call.1} parent=1 // pred_check_branch
      %57 = sbr.rel (0) target = $region25
    $region24: #{tpu_custom_call.1} parent=1 // pred_region
      %59 = dma.done [#allocation6], 128
    $region25: #{tpu_custom_call.1} parent=1 // pred_fallthru
      _
    // Predicated region
    $region26: #{tpu_custom_call.1} parent=1 // pred_check
      _
    $region27: #{tpu_custom_call.1} parent=1 // pred_check_branch
      %61 = sbr.rel (0) target = $region29
    $region28: #{tpu_custom_call.1} parent=1 // pred_region
      %63 = dma.done [#allocation6], 384
    $region29: #{tpu_custom_call.1} parent=1 // pred_fallthru
      _
    %v65 = vld [vmem:[#allocation2] sm:$0xf]
    %v66 = vld [vmem:[#allocation7] sm:$0xf]
    %v67 = vld [vmem:[#allocation7 + $0x4] sm:$0xf]
    %v68 = vld [vmem:[#allocation7 + $0x8] sm:$0xf]
    %v69 = vld [vmem:[#allocation7 + $0xc] sm:$0xf]
    %v70 = vld [vmem:[#allocation7 + $0x10] sm:$0xf]
    %v71 = vld [vmem:[#allocation7 + $0x14] sm:$0xf]
    %v72 = vld [vmem:[%s3] sm:$0x1]
    %v74 = vperm.slane %v72, 0
    %v82 = vunpack.c.l.b16 %v66
    %v83 = vunpack.c.l.b16 %v67
    %v84 = vunpack.c.l.b16 %v68
    %v85 = vunpack.c.l.b16 %v69
    %v86 = vunpack.c.l.b16 %v70
    %v87 = vunpack.c.l.b16 %v71
    %v88 = vpack.c.b16 %v83, %v82
    %v89 = vpack.c.b16 %v85, %v84
    %v90 = vpack.c.b16 %v87, %v86
    %vm94 = vcmask 392192
    %v96 = vsel %vm94, %v65, 0
    %98 = vmatpush.bf16.msra.mxu0 0
    %99 = vmatpush.bf16.msra.mxu0 0
    %100 = vmatpush.bf16.msra.mxu0 0
    %101 = vmatpush.bf16.msra.mxu0 0
    %102 = vmatpush.bf16.msra.mxu0 0
    %103 = vmatpush.bf16.msra.mxu0 %v90
    %104 = vmatpush.bf16.msra.mxu0 %v89
    %105 = vmatpush.bf16.msra.mxu0 %v88
    %106 = vmatmul.bf16.gmra.mxu0 %v96
    %v107 = vpop.f32.mrf.mxu0
    %v108 = vadd.f32 %v74, %v107
    %v109 = vpop.f32.mrf.mxu0
    %110 = vdwg.mxu0
    %v111 = vmul.f32 %v108, 0.5
    %v112 = vtanh.pop %v111
    %v113 = vmul.f32 %v112, 0.5
    %v114 = vadd.f32 %v113, 0.5
    %v115 = vtanh.pop %v108
    %v116 = vld [vmem:[#allocation5] sm:$0xff]
    %118 = vrot.lane.b32.xlu0 %v116, 32
    %v119 = vpop.permute.xlu0 %118
    %v121 = vmul.f32 %v114, %v119
    %123 = vrot.lane.b32.xlu0 %v115, 64
    %v124 = vpop.permute.xlu0 %123
    %v126 = vmul.f32 %v114, %v124
    %128 = vrot.lane.b32.xlu0 %v126, 32
    %v129 = vpop.permute.xlu0 %128
    %v131 = vadd.f32 %v121, %v129
    %v132 = vtanh.pop %v131
    %134 = vrot.lane.b32.xlu0 %v132, 64
    %v135 = vpop.permute.xlu0 %134
    %v137 = vmul.f32 %v114, %v135
    %139 = vrot.lane.b32.xlu0 %v137, 32
    %v140 = vpop.permute.xlu0 %139
    %vm142 = vcmask 261120
    %143 = vst.msk [vmem:[#allocation8] sm:$0xff] %vm142, %v140
    %145 = vrot.lane.b32.xlu0 %v131, 96
    %v146 = vpop.permute.xlu0 %145
    %148 = vst.msk [vmem:[#allocation9] sm:$0xff] %vm142, %v146
    // Predicated region
    $region30: #{tpu_custom_call.1} parent=1 // pred_check
      _
    $region31: #{tpu_custom_call.1} parent=1 // pred_check_branch
      %150 = sbr.rel (0) target = $region33
    $region32: #{tpu_custom_call.1} parent=1 // pred_region
      %152 = vsyncadd [#allocation4], 0
      %s154 = sshll.u32 [#allocation8], 4
      %s155 = int_to_ptr.vmem [resolvable:$true] %s154
      %s156 = sshll.u32 %s4, 4
      %s157 = int_to_ptr.hbm [resolvable:$true] %s156
      %159 = dma.vmem_to_hbm [thread:$0]  %s155, 128, %s157, [#allocation4]
    $region33: #{tpu_custom_call.1} parent=1 // pred_fallthru
      _
    // Predicated region
    $region34: #{tpu_custom_call.1} parent=1 // pred_check
      _
    $region35: #{tpu_custom_call.1} parent=1 // pred_check_branch
      %161 = sbr.rel (0) target = $region37
    $region36: #{tpu_custom_call.1} parent=1 // pred_region
      %163 = vsyncadd [#allocation10], 0
      %s165 = sshll.u32 [#allocation9], 4
      %s166 = int_to_ptr.vmem [resolvable:$true] %s165
      %s167 = sshll.u32 %s5, 4
      %s168 = int_to_ptr.hbm [resolvable:$true] %s167
      %170 = dma.vmem_to_hbm [thread:$0]  %s166, 128, %s168, [#allocation10]
    $region37: #{tpu_custom_call.1} parent=1 // pred_fallthru
      _
    // Predicated region
    $region38: #{tpu_custom_call.1} parent=1 // pred_check
      _
    $region39: #{tpu_custom_call.1} parent=1 // pred_check_branch
      %172 = sbr.rel (0) target = $region41
    $region40: #{tpu_custom_call.1} parent=1 // pred_region
      %174 = dma.done [#allocation4], 128
    $region41: #{tpu_custom_call.1} parent=1 // pred_fallthru
      _
    // Predicated region
    $region42: #{tpu_custom_call.1} parent=1 // pred_check
      _
    $region43: #{tpu_custom_call.1} parent=1 // pred_check_branch
      %176 = sbr.rel (0) target = $region45
    $region44: #{tpu_custom_call.1} parent=1 // pred_region
      %178 = dma.done [#allocation10], 128
    $region45: #{tpu_custom_call.1} parent=1 // pred_fallthru
      _
    %179 = vsyncpa [#allocation3], 1
    %180 = vsyncpa [#allocation6], 1
    %181 = vsyncpa [#allocation4], 1
    %182 = vsyncpa [#allocation10], 1

</llo_original>
